<compile_context>
chip_gen: v7x
topology: tpu7x:2x2x1
jax: 0.10.0
libtpu: 0.0.40
codegen_flags: <defaults>
</compile_context>

<pallas_src>
import jax
import jax.numpy as jnp
import numpy as np
from jax.experimental import pallas as pl
from jax.experimental.pallas import tpu as pltpu


# ------------------------------ Pallas kernel -------------------------------

def _elementwise_linear_kernel(x_ref, w_ref, o_ref):
    # x_ref: (bm, F) tile; w_ref: (1, F) resident weight row -> VPU broadcast.
    o_ref[...] = x_ref[...] * w_ref[...]


# --------------------------------- wrapper ----------------------------------

def _round_down(x, m):
    return (x // m) * m


def elementwise_linear(x, weights, *, target_block_bytes=4 << 20):
    """out = weights * x, with weights broadcast along the last dim of x."""
    orig_shape = x.shape
    f = int(weights.shape[0])
    assert orig_shape[-1] == f, "last dim of x must equal input_features"

    x2 = x.reshape(-1, f)                       # [M, F] slab, feature dim on lanes
    m = x2.shape[0]
    dtype = x2.dtype
    itemsize = jnp.dtype(dtype).itemsize
    w = weights.astype(dtype)

    # ---- lane density: make the last dim a multiple of 128 when possible ----
    # Fold k rows into lanes ((M, F) -> (M/k, k*F), weights tiled k times) so
    # the output last dim is lane-dense -> unmasked full-width stores.
    fold = 1
    if f % 128 != 0:
        for k in (2, 4, 8, 16, 32, 64, 128):
            if (k * f) % 128 == 0 and m % k == 0:
                fold = k
                break
    if fold > 1:
        x2 = x2.reshape(m // fold, fold * f)
        w_row = jnp.tile(w, fold).reshape(1, fold * f)
    else:
        w_row = w.reshape(1, f)
    m_eff, f_eff = x2.shape

    # ---- tile size from a byte budget, aligned to the dtype sublane pack ----
    sublane_pack = {4: 8, 2: 16, 1: 32}.get(itemsize, 8)
    bytes_per_row = f_eff * itemsize
    bm = max(sublane_pack,
             _round_down(max(1, target_block_bytes // bytes_per_row), sublane_pack))

    # When there is enough total work, keep >= 4 grid steps so the "parallel"
    # row axis can shard across v7x's two TensorCores (grid=(1,) cannot).
    if m_eff * bytes_per_row >= 2 * target_block_bytes:
        cap = _round_down(m_eff // 4, sublane_pack)
        if cap >= sublane_pack:
            bm = min(bm, cap)

    if bm >= m_eff:
        bm = m_eff                              # tiny problem: one full-extent block
    grid = (pl.cdiv(m_eff, bm),)

    out = pl.pallas_call(
        _elementwise_linear_kernel,
        out_shape=jax.ShapeDtypeStruct((m_eff, f_eff), dtype),
        grid=grid,
        in_specs=[
            pl.BlockSpec((bm, f_eff), lambda i: (i, 0)),   # row tile of x
            pl.BlockSpec((1, f_eff), lambda i: (0, 0)),    # weight row, resident
        ],
        out_specs=pl.BlockSpec((bm, f_eff), lambda i: (i, 0)),
        compiler_params=pltpu.CompilerParams(
            dimension_semantics=("parallel",),             # megacore-shardable
            vmem_limit_bytes=48 * 1024 * 1024,             # > v5e 16 MiB default,
                                                           # < v7x 64 MiB physical
        ),
        cost_estimate=pl.CostEstimate(
            flops=m_eff * f_eff,
            transcendentals=0,
            bytes_accessed=(2 * m_eff * f_eff + f_eff) * itemsize,
        ),
    )(x2, w_row)

    return out.reshape(orig_shape)


# --------------------------------- driver -----------------------------------

if __name__ == "__main__":
    key = jax.random.PRNGKey(0)
    kx, kw, kx2, kw2 = jax.random.split(key, 4)

    # Case 1: module's default init (weights = zeros), lane-dense F = 128.
    f1 = 128
    x1 = jax.random.normal(kx, (2, 4, 16, f1), jnp.float32)
    w_zero = jnp.zeros((f1,), jnp.float32)
    out_zero = jax.block_until_ready(elementwise_linear(x1, w_zero))
    assert out_zero.shape == x1.shape
    assert np.allclose(np.asarray(out_zero), 0.0), "zero-weight output not zero"

    # Case 2: non-trivial weights, lane-dense F = 128.
    w1 = jax.random.normal(kw, (f1,), jnp.float32)
    out1 = jax.block_until_ready(elementwise_linear(x1, w1))
    ref1 = np.asarray(w1) * np.asarray(x1)
    assert out1.shape == x1.shape
    assert np.allclose(np.asarray(out1), ref1, rtol=1e-6, atol=1e-6), \
        "Pallas output does not match reference (F=128)"

    # Case 3: F = 32 (< 128) exercises the row->lane folding path.
    f2 = 32
    x_small = jax.random.normal(kx2, (2, 4, 16, f2), jnp.float32)
    w2 = jax.random.normal(kw2, (f2,), jnp.float32)
    out2 = jax.block_until_ready(elementwise_linear(x_small, w2))
    ref2 = np.asarray(w2) * np.asarray(x_small)
    assert out2.shape == x_small.shape
    assert np.allclose(np.asarray(out2), ref2, rtol=1e-6, atol=1e-6), \
        "Pallas output does not match reference (F=32, folded)"

    print("KERNEL_OK")
</pallas_src>

<mosaic_0001>
module attributes {stable_mosaic.version = 11 : i64} {
  func.func @_elementwise_linear_kernel(%arg0: i32, %arg1: memref<128x128xf32, #tpu.memory_space<vmem>>, %arg2: memref<1x128xf32, #tpu.memory_space<vmem>>, %arg3: memref<128x128xf32, #tpu.memory_space<vmem>>) attributes {dimension_semantics = [#tpu.dimension_semantics<parallel>], iteration_bounds = array<i64: 1>, scalar_prefetch = 0 : i64, scratch_operands = 0 : i64, tpu.core_type = #tpu.core_type<tc>, window_params = [{transform_indices = @transform_0, window_bounds = array<i64: 128, 128>}, {pipeline_mode = #tpu.pipeline_mode<synchronous>, transform_indices = @transform_1, window_bounds = array<i64: 1, 128>}, {transform_indices = @transform_2, window_bounds = array<i64: 128, 128>}]} {
    %c0 = arith.constant 0 : index
    %c0_0 = arith.constant 0 : index
    %0 = vector.load %arg1[%c0, %c0_0] : memref<128x128xf32, #tpu.memory_space<vmem>>, vector<128x128xf32>
    %c0_1 = arith.constant 0 : index
    %c0_2 = arith.constant 0 : index
    %1 = vector.load %arg2[%c0_1, %c0_2] : memref<1x128xf32, #tpu.memory_space<vmem>>, vector<1x128xf32>
    %2 = vector.broadcast %1 : vector<1x128xf32> to vector<128x128xf32>
    %3 = arith.mulf %0, %2 : vector<128x128xf32>
    %c0_3 = arith.constant 0 : index
    %c0_4 = arith.constant 0 : index
    %4 = vector.load %arg3[%c0_3, %c0_4] : memref<128x128xf32, #tpu.memory_space<vmem>>, vector<128x128xf32>
    tpu.vector_store %arg3[%c0_3, %c0_4], %3 {strides = array<i32>} : memref<128x128xf32, #tpu.memory_space<vmem>>, vector<128x128xf32>,
    return
  }
  func.func @transform_0(%arg0: i32) -> (i32, i32) {
    %c0_i32 = arith.constant 0 : i32
    %c0_i32_0 = arith.constant 0 : i32
    return %arg0, %c0_i32 : i32, i32
  }
  func.func @transform_1(%arg0: i32) -> (i32, i32) {
    %c0_i32 = arith.constant 0 : i32
    %c0_i32_0 = arith.constant 0 : i32
    %c0_i32_1 = arith.constant 0 : i32
    return %c0_i32, %c0_i32_0 : i32, i32
  }
  func.func @transform_2(%arg0: i32) -> (i32, i32) {
    %c0_i32 = arith.constant 0 : i32
    %c0_i32_0 = arith.constant 0 : i32
    return %arg0, %c0_i32 : i32, i32
  }
}

</mosaic_0001>

<llo_original>
// kernel: tpu_custom_call.1
$region0: #{tpu_custom_call.1}
  #allocation0 [shape = 'u32[]', space=smem, size = 0x4, offset = 0x4, fixed_abs, tag = 'smem constant byte address 0x4 - core index']
  #allocation1 [shape = 'u32[144,128]{1,0:T(1,128)}', space=vmem, size = 0x12000, scoped, tag = 'internal scratch']
  %s0 = inlined_call_operand.hbm [shape: f32[128,128], index: 0, kind: input, shape index: {}]
  %s1 = inlined_call_operand.vmem [shape: f32[1,128], index: 1, kind: input, shape index: {}]
  %s2 = inlined_call_operand.hbm [shape: f32[128,128], index: 2, kind: output, shape index: {}]
  %s3 = sld [smem:[#allocation0]]
  $region22: #{tpu_custom_call.1} parent=0
    _
  %s5 = ssub.s32 1, %s3
  %s6 = scalar_select 0, %s5, %s3
  $region1: #{tpu_custom_call.1} parent=0
    #allocation2 [shape = 'u8[65536]{0}', space=vmem, size = 0x10000, scoped, tag = 'input window, operand 0, single buffered']
    #allocation3 [shape = 's32[1]{0}', space=sflag, size = 0x4, scoped, tag = 'scoped memory for tpu_custom_call.1']
    #allocation4 [shape = 's32[1]{0}', space=sflag, size = 0x4, scoped, tag = 'scoped memory for tpu_custom_call.1']
    #allocation5 [shape = 'u8[65536]{0}', space=vmem, size = 0x10000, scoped, tag = 'output window, operand 0, single buffered']
    %7 = vsyncpa [#allocation3], 0
    %8 = vsyncpa [#allocation4], 0
    // Predicated region
    $region2: #{tpu_custom_call.1} parent=1 // pred_check
      _
    $region3: #{tpu_custom_call.1} parent=1 // pred_check_branch
      %10 = sbr.rel (0) target = $region5
    $region4: #{tpu_custom_call.1} parent=1 // pred_region
      %s12 = ssub.s32 2048, 2048
      %13 = vsyncadd [#allocation3], %s12
      %s14 = sshll.u32 [#allocation2], 4
      %s15 = int_to_ptr.vmem [resolvable:$true] %s14
      %20 = dma.hbm_to_vmem [thread:$0]  %s0, 2048, %s15, [#allocation3], 128, 128, 8
    $region5: #{tpu_custom_call.1} parent=1 // pred_fallthru
      _
    // Predicated region
    $region6: #{tpu_custom_call.1} parent=1 // pred_check
      _
    $region7: #{tpu_custom_call.1} parent=1 // pred_check_branch
      %22 = sbr.rel (0) target = $region9
    $region8: #{tpu_custom_call.1} parent=1 // pred_region
      _
    $region9: #{tpu_custom_call.1} parent=1 // pred_fallthru
      _
    // Predicated region
    $region10: #{tpu_custom_call.1} parent=1 // pred_check
      _
    $region11: #{tpu_custom_call.1} parent=1 // pred_check_branch
      %24 = sbr.rel (0) target = $region13
    $region12: #{tpu_custom_call.1} parent=1 // pred_region
      %25 = dma.done [#allocation3], 2048
    $region13: #{tpu_custom_call.1} parent=1 // pred_fallthru
      _
    %v26 = vld [vmem:[#allocation2] sm:$0xff]
    %v27 = vld [vmem:[#allocation2 + $0x8] sm:$0xff]
    %v28 = vld [vmem:[#allocation2 + $0x10] sm:$0xff]
    %v29 = vld [vmem:[#allocation2 + $0x18] sm:$0xff]
    %v30 = vld [vmem:[#allocation2 + $0x20] sm:$0xff]
    %v31 = vld [vmem:[#allocation2 + $0x28] sm:$0xff]
    %v32 = vld [vmem:[#allocation2 + $0x30] sm:$0xff]
    %v33 = vld [vmem:[#allocation2 + $0x38] sm:$0xff]
    %v34 = vld [vmem:[#allocation2 + $0x40] sm:$0xff]
    %v35 = vld [vmem:[#allocation2 + $0x48] sm:$0xff]
    %v36 = vld [vmem:[#allocation2 + $0x50] sm:$0xff]
    %v37 = vld [vmem:[#allocation2 + $0x58] sm:$0xff]
    %v38 = vld [vmem:[#allocation2 + $0x60] sm:$0xff]
    %v39 = vld [vmem:[#allocation2 + $0x68] sm:$0xff]
    %v40 = vld [vmem:[#allocation2 + $0x70] sm:$0xff]
    %v41 = vld [vmem:[#allocation2 + $0x78] sm:$0xff]
    %v42 = vld [vmem:[%s1] sm:$0x1]
    %v44 = vlaneseq
    %v45 = vshrl.u32 %v44, 7
    %v46 = vsub.s32 0, %v45
    %v47 = vrot.slane %v42, %v46
    %v49 = vmul.f32 %v26, %v47
    %v50 = vmul.f32 %v27, %v47
    %v51 = vmul.f32 %v28, %v47
    %v52 = vmul.f32 %v29, %v47
    %v53 = vmul.f32 %v30, %v47
    %v54 = vmul.f32 %v31, %v47
    %v55 = vmul.f32 %v32, %v47
    %v56 = vmul.f32 %v33, %v47
    %v57 = vmul.f32 %v34, %v47
    %v58 = vmul.f32 %v35, %v47
    %v59 = vmul.f32 %v36, %v47
    %v60 = vmul.f32 %v37, %v47
    %v61 = vmul.f32 %v38, %v47
    %v62 = vmul.f32 %v39, %v47
    %v63 = vmul.f32 %v40, %v47
    %v64 = vmul.f32 %v41, %v47
    %65 = vst [vmem:[#allocation5] sm:$0xff] %v49
    %66 = vst [vmem:[#allocation5 + $0x8] sm:$0xff] %v50
    %67 = vst [vmem:[#allocation5 + $0x10] sm:$0xff] %v51
    %68 = vst [vmem:[#allocation5 + $0x18] sm:$0xff] %v52
    %69 = vst [vmem:[#allocation5 + $0x20] sm:$0xff] %v53
    %70 = vst [vmem:[#allocation5 + $0x28] sm:$0xff] %v54
    %71 = vst [vmem:[#allocation5 + $0x30] sm:$0xff] %v55
    %72 = vst [vmem:[#allocation5 + $0x38] sm:$0xff] %v56
    %73 = vst [vmem:[#allocation5 + $0x40] sm:$0xff] %v57
    %74 = vst [vmem:[#allocation5 + $0x48] sm:$0xff] %v58
    %75 = vst [vmem:[#allocation5 + $0x50] sm:$0xff] %v59
    %76 = vst [vmem:[#allocation5 + $0x58] sm:$0xff] %v60
    %77 = vst [vmem:[#allocation5 + $0x60] sm:$0xff] %v61
    %78 = vst [vmem:[#allocation5 + $0x68] sm:$0xff] %v62
    %79 = vst [vmem:[#allocation5 + $0x70] sm:$0xff] %v63
    %80 = vst [vmem:[#allocation5 + $0x78] sm:$0xff] %v64
    // Predicated region
    $region14: #{tpu_custom_call.1} parent=1 // pred_check
      _
    $region15: #{tpu_custom_call.1} parent=1 // pred_check_branch
      %82 = sbr.rel (0) target = $region17
    $region16: #{tpu_custom_call.1} parent=1 // pred_region
      %s84 = ssub.s32 2048, 2048
      %85 = vsyncadd [#allocation4], %s84
      %s86 = sshll.u32 [#allocation5], 4
      %s87 = int_to_ptr.vmem [resolvable:$true] %s86
      %92 = dma.vmem_to_hbm [thread:$0]  %s87, 2048, %s2, [#allocation4], 128, 128, 8
    $region17: #{tpu_custom_call.1} parent=1 // pred_fallthru
      _
    // Predicated region
    $region18: #{tpu_custom_call.1} parent=1 // pred_check
      _
    $region19: #{tpu_custom_call.1} parent=1 // pred_check_branch
      %94 = sbr.rel (0) target = $region21
    $region20: #{tpu_custom_call.1} parent=1 // pred_region
      %95 = dma.done [#allocation4], 2048
    $region21: #{tpu_custom_call.1} parent=1 // pred_fallthru
      _
    %96 = vsyncpa [#allocation3], 1
    %97 = vsyncpa [#allocation4], 1

</llo_original>
